<compile_context>
chip_gen: v6e
topology: v6e:2x2x1
jax: 0.10.0
libtpu: 0.0.40
codegen_flags: <defaults>
</compile_context>

<pallas_src>
import jax
import jax.numpy as jnp
from jax import lax
from jax.experimental import pallas as pl
from jax.experimental.pallas import tpu as pltpu


# ----------------------------- kernels ------------------------------------ #

def _conv_down_kernel(e_ref, o_ref, w_ref, b_ref, out_ref):
    """Strided conv as dense matmul on pre-split even/odd time streams.

    e_ref : (Bb, T_out+1, C)  even time positions  x[2t]
    o_ref : (Bb, T_out+1, C)  odd  time positions  x[2t+1]
    w_ref : (3C, C)           taps stacked along K: [W0^T ; W1^T ; W2^T]
    b_ref : (1, C)
    out   : (Bb, T_out, C)    y[t] = W0 x[2t] + W1 x[2t+1] + W2 x[2t+2] + b
    """
    Bb, Tp1, C = e_ref.shape
    T_out = Tp1 - 1

    e = e_ref[...]
    o = o_ref[...]

    x0 = e[:, :T_out, :].reshape(Bb * T_out, C)   # tap 0: x[2t]
    x1 = o[:, :T_out, :].reshape(Bb * T_out, C)   # tap 1: x[2t+1]
    x2 = e[:, 1:, :].reshape(Bb * T_out, C)       # tap 2: x[2t+2]

    # One fused MXU matmul with K = 3C.
    xcat = jnp.concatenate([x0, x1, x2], axis=-1)             # (M, 3C)
    y = jnp.dot(xcat, w_ref[...],
                preferred_element_type=jnp.float32) + b_ref[...]
    out_ref[...] = y.reshape(Bb, T_out, C).astype(out_ref.dtype)


def _avgpool_kernel(e_ref, o_ref, out_ref):
    """avg_pool1d(kernel=2, stride=2) on pre-split even/odd streams."""
    out_ref[...] = ((e_ref[...] + o_ref[...]) * 0.5).astype(out_ref.dtype)


# ----------------------------- wrappers ------------------------------------ #

def _pick_block_b(B, t_out, target_rows=128):
    """Smallest divisor of B such that Bb * t_out >= target_rows (MXU fill)."""
    for bb in range(1, B + 1):
        if B % bb == 0 and bb * t_out >= target_rows:
            return bb
    return B


def _split_even_odd(x_cl, length_pairs):
    """x_cl: (B, T, C) channels-last; returns even/odd streams of `length_pairs`."""
    B, T, C = x_cl.shape
    need = 2 * length_pairs
    if need > T:
        x_cl = jnp.pad(x_cl, ((0, 0), (0, need - T), (0, 0)))
    else:
        x_cl = x_cl[:, :need, :]
    pairs = x_cl.reshape(B, length_pairs, 2, C)
    return pairs[:, :, 0, :], pairs[:, :, 1, :]


def downsample1d(x_bct, with_conv, weight=None, bias=None):
    """x_bct: (B, C, T) float32 (PyTorch Conv1d layout). Returns (B, C, T_out)."""
    B, C, T = x_bct.shape
    x_cl = jnp.transpose(x_bct, (0, 2, 1))                    # (B, T, C)

    if with_conv:
        # torch: pad right by 1 zero, then conv k=3 s=2 valid.
        T_out = (T - 2) // 2 + 1
        # even stream needs indices 0..2*T_out (T_out+1 entries); pad to 2*(T_out+1)
        x_even, x_odd = _split_even_odd(x_cl, T_out + 1)      # (B, T_out+1, C) each

        # weight: (C_out, C_in, 3) -> [W0^T ; W1^T ; W2^T]  shape (3*C_in, C_out)
        w_cat = jnp.concatenate(
            [jnp.transpose(weight[:, :, k], (1, 0)) for k in range(3)], axis=0)
        b_row = bias.reshape(1, C)

        Bb = _pick_block_b(B, T_out)
        grid = (B // Bb,)
        out_cl = pl.pallas_call(
            _conv_down_kernel,
            out_shape=jax.ShapeDtypeStruct((B, T_out, C), x_bct.dtype),
            grid=grid,
            in_specs=[
                pl.BlockSpec((Bb, T_out + 1, C), lambda i: (i, 0, 0)),
                pl.BlockSpec((Bb, T_out + 1, C), lambda i: (i, 0, 0)),
                pl.BlockSpec((3 * C, C), lambda i: (0, 0)),
                pl.BlockSpec((1, C), lambda i: (0, 0)),
            ],
            out_specs=pl.BlockSpec((Bb, T_out, C), lambda i: (i, 0, 0)),
            compiler_params=pltpu.CompilerParams(
                dimension_semantics=("parallel",)),
        )(x_even, x_odd, w_cat, b_row)
    else:
        T_out = T // 2
        x_even, x_odd = _split_even_odd(x_cl, T_out)          # (B, T_out, C) each
        Bb = _pick_block_b(B, T_out)
        grid = (B // Bb,)
        out_cl = pl.pallas_call(
            _avgpool_kernel,
            out_shape=jax.ShapeDtypeStruct((B, T_out, C), x_bct.dtype),
            grid=grid,
            in_specs=[
                pl.BlockSpec((Bb, T_out, C), lambda i: (i, 0, 0)),
                pl.BlockSpec((Bb, T_out, C), lambda i: (i, 0, 0)),
            ],
            out_specs=pl.BlockSpec((Bb, T_out, C), lambda i: (i, 0, 0)),
            compiler_params=pltpu.CompilerParams(
                dimension_semantics=("parallel",)),
        )(x_even, x_odd)

    return jnp.transpose(out_cl, (0, 2, 1))                   # (B, C, T_out)


# ----------------------------- references ---------------------------------- #

def reference_conv(x_bct, weight, bias):
    x_pad = jnp.pad(x_bct, ((0, 0), (0, 0), (0, 1)))
    out = lax.conv_general_dilated(
        x_pad, weight, window_strides=(2,), padding="VALID",
        dimension_numbers=("NCH", "OIH", "NCH"))
    return out + bias[None, :, None]


def reference_pool(x_bct):
    B, C, T = x_bct.shape
    T_out = T // 2
    return x_bct[:, :, :2 * T_out].reshape(B, C, T_out, 2).mean(axis=-1)


# ------------------------------- main --------------------------------------- #

if __name__ == "__main__":
    B, C, T = 4, 128, 64   # C multiple of 128 -> fully lane-dense tiles

    key = jax.random.PRNGKey(0)
    k0, k1, k2 = jax.random.split(key, 3)
    x = jax.random.normal(k0, (B, C, T), jnp.float32)
    weight = 0.05 * jax.random.normal(k1, (C, C, 3), jnp.float32)
    bias = 0.05 * jax.random.normal(k2, (C,), jnp.float32)

    # with_conv=True path
    out_conv = jax.block_until_ready(
        downsample1d(x, with_conv=True, weight=weight, bias=bias))
    ref_conv = reference_conv(x, weight, bias)
    assert out_conv.shape == ref_conv.shape == (B, C, T // 2)
    assert jnp.allclose(out_conv, ref_conv, rtol=1e-4, atol=1e-5), (
        float(jnp.max(jnp.abs(out_conv - ref_conv))))

    # with_conv=False path
    out_pool = jax.block_until_ready(downsample1d(x, with_conv=False))
    ref_pool = reference_pool(x)
    assert out_pool.shape == ref_pool.shape == (B, C, T // 2)
    assert jnp.allclose(out_pool, ref_pool, rtol=1e-5, atol=1e-6), (
        float(jnp.max(jnp.abs(out_pool - ref_pool))))

    print("KERNEL_OK")
</pallas_src>

<mosaic_0001>
module attributes {stable_mosaic.version = 11 : i64} {
  func.func @_conv_down_kernel(%arg0: i32, %arg1: memref<4x33x128xf32, #tpu.memory_space<vmem>>, %arg2: memref<4x33x128xf32, #tpu.memory_space<vmem>>, %arg3: memref<384x128xf32, #tpu.memory_space<vmem>>, %arg4: memref<1x128xf32, #tpu.memory_space<vmem>>, %arg5: memref<4x32x128xf32, #tpu.memory_space<vmem>>) attributes {dimension_semantics = [#tpu.dimension_semantics<parallel>], iteration_bounds = array<i64: 1>, scalar_prefetch = 0 : i64, scratch_operands = 0 : i64, tpu.core_type = #tpu.core_type<tc>, window_params = [{transform_indices = @transform_0, window_bounds = array<i64: 4, 33, 128>}, {transform_indices = @transform_1, window_bounds = array<i64: 4, 33, 128>}, {pipeline_mode = #tpu.pipeline_mode<synchronous>, transform_indices = @transform_2, window_bounds = array<i64: 384, 128>}, {pipeline_mode = #tpu.pipeline_mode<synchronous>, transform_indices = @transform_3, window_bounds = array<i64: 1, 128>}, {transform_indices = @transform_4, window_bounds = array<i64: 4, 32, 128>}]} {
    %c0 = arith.constant 0 : index
    %c0_0 = arith.constant 0 : index
    %c0_1 = arith.constant 0 : index
    %0 = vector.load %arg1[%c0, %c0_0, %c0_1] : memref<4x33x128xf32, #tpu.memory_space<vmem>>, vector<4x33x128xf32>
    %c0_2 = arith.constant 0 : index
    %c0_3 = arith.constant 0 : index
    %c0_4 = arith.constant 0 : index
    %1 = vector.load %arg2[%c0_2, %c0_3, %c0_4] : memref<4x33x128xf32, #tpu.memory_space<vmem>>, vector<4x33x128xf32>
    %2 = vector.extract_strided_slice %0 {offsets = [0, 0, 0], sizes = [4, 32, 128], strides = [1, 1, 1]} : vector<4x33x128xf32> to vector<4x32x128xf32>
    %3 = vector.shape_cast %2 : vector<4x32x128xf32> to vector<128x128xf32>
    %4 = vector.extract_strided_slice %1 {offsets = [0, 0, 0], sizes = [4, 32, 128], strides = [1, 1, 1]} : vector<4x33x128xf32> to vector<4x32x128xf32>
    %5 = vector.shape_cast %4 : vector<4x32x128xf32> to vector<128x128xf32>
    %6 = vector.extract_strided_slice %0 {offsets = [0, 1, 0], sizes = [4, 32, 128], strides = [1, 1, 1]} : vector<4x33x128xf32> to vector<4x32x128xf32>
    %7 = vector.shape_cast %6 : vector<4x32x128xf32> to vector<128x128xf32>
    %8 = tpu.concatenate %3, %5, %7 in 1 : vector<128x128xf32>, vector<128x128xf32>, vector<128x128xf32> -> vector<128x384xf32>
    %c0_5 = arith.constant 0 : index
    %c0_6 = arith.constant 0 : index
    %9 = vector.load %arg3[%c0_5, %c0_6] : memref<384x128xf32, #tpu.memory_space<vmem>>, vector<384x128xf32>
    %cst = arith.constant dense<0.000000e+00> : vector<128x128xf32>
    %10 = tpu.matmul %8, %9, %cst {dimension_numbers = #tpu.dot_dimension_numbers<[1], [0], [0], [1], [0, 0, 1, 1], [], []>} : vector<128x384xf32>, vector<384x128xf32>, vector<128x128xf32> -> vector<128x128xf32>
    %c0_7 = arith.constant 0 : index
    %c0_8 = arith.constant 0 : index
    %11 = vector.load %arg4[%c0_7, %c0_8] : memref<1x128xf32, #tpu.memory_space<vmem>>, vector<1x128xf32>
    %12 = vector.broadcast %11 : vector<1x128xf32> to vector<128x128xf32>
    %13 = arith.addf %10, %12 : vector<128x128xf32>
    %14 = vector.shape_cast %13 : vector<128x128xf32> to vector<4x32x128xf32>
    %c0_9 = arith.constant 0 : index
    %c0_10 = arith.constant 0 : index
    %c0_11 = arith.constant 0 : index
    %15 = vector.load %arg5[%c0_9, %c0_10, %c0_11] : memref<4x32x128xf32, #tpu.memory_space<vmem>>, vector<4x32x128xf32>
    tpu.vector_store %arg5[%c0_9, %c0_10, %c0_11], %14 {strides = array<i32>} : memref<4x32x128xf32, #tpu.memory_space<vmem>>, vector<4x32x128xf32>,
    return
  }
  func.func @transform_0(%arg0: i32) -> (i32, i32, i32) {
    %c0_i32 = arith.constant 0 : i32
    %c0_i32_0 = arith.constant 0 : i32
    %c0_i32_1 = arith.constant 0 : i32
    return %arg0, %c0_i32, %c0_i32_0 : i32, i32, i32
  }
  func.func @transform_1(%arg0: i32) -> (i32, i32, i32) {
    %c0_i32 = arith.constant 0 : i32
    %c0_i32_0 = arith.constant 0 : i32
    %c0_i32_1 = arith.constant 0 : i32
    return %arg0, %c0_i32, %c0_i32_0 : i32, i32, i32
  }
  func.func @transform_2(%arg0: i32) -> (i32, i32) {
    %c0_i32 = arith.constant 0 : i32
    %c0_i32_0 = arith.constant 0 : i32
    %c0_i32_1 = arith.constant 0 : i32
    return %c0_i32, %c0_i32_0 : i32, i32
  }
  func.func @transform_3(%arg0: i32) -> (i32, i32) {
    %c0_i32 = arith.constant 0 : i32
    %c0_i32_0 = arith.constant 0 : i32
    %c0_i32_1 = arith.constant 0 : i32
    return %c0_i32, %c0_i32_0 : i32, i32
  }
  func.func @transform_4(%arg0: i32) -> (i32, i32, i32) {
    %c0_i32 = arith.constant 0 : i32
    %c0_i32_0 = arith.constant 0 : i32
    %c0_i32_1 = arith.constant 0 : i32
    return %arg0, %c0_i32, %c0_i32_0 : i32, i32, i32
  }
}

</mosaic_0001>

<llo_original>
// kernel: tpu_custom_call.1
$region0: #{tpu_custom_call.1}
  #allocation0 [shape = 'u32[]', space=smem, size = 0x4, offset = 0x4, fixed_abs, tag = 'smem constant byte address 0x4 - core index']
  #allocation1 [shape = 'u32[144,128]{1,0:T(1,128)}', space=vmem, size = 0x12000, scoped, tag = 'internal scratch']
  %s0 = inlined_call_operand.vmem [shape: f32[4,33,128], index: 0, kind: input, shape index: {}]
  %s1 = inlined_call_operand.vmem [shape: f32[4,33,128], index: 1, kind: input, shape index: {}]
  %s2 = inlined_call_operand.vmem [shape: f32[384,128], index: 2, kind: input, shape index: {}]
  %s3 = inlined_call_operand.vmem [shape: f32[1,128], index: 3, kind: input, shape index: {}]
  %s4 = inlined_call_operand.hbm [shape: f32[4,32,128], index: 4, kind: output, shape index: {}]
  %s5 = sld [smem:[#allocation0]]
  $region26: #{tpu_custom_call.1} parent=0
    _
  %s7 = ssub.s32 1, %s5
  %s8 = scalar_select 0, %s7, %s5
  $region1: #{tpu_custom_call.1} parent=0
    #allocation2 [shape = 'u8[65536]{0}', space=vmem, size = 0x10000, scoped, tag = 'output window, operand 0, single buffered']
    #allocation3 [shape = 's32[1]{0}', space=sflag, size = 0x4, scoped, tag = 'scoped memory for tpu_custom_call.1']
    %9 = vsyncpa [#allocation3], 0
    // Predicated region
    $region2: #{tpu_custom_call.1} parent=1 // pred_check
      _
    $region3: #{tpu_custom_call.1} parent=1 // pred_check_branch
      %11 = sbr.rel (0) target = $region5
    $region4: #{tpu_custom_call.1} parent=1 // pred_region
      _
    $region5: #{tpu_custom_call.1} parent=1 // pred_fallthru
      _
    // Predicated region
    $region6: #{tpu_custom_call.1} parent=1 // pred_check
      _
    $region7: #{tpu_custom_call.1} parent=1 // pred_check_branch
      %13 = sbr.rel (0) target = $region9
    $region8: #{tpu_custom_call.1} parent=1 // pred_region
      _
    $region9: #{tpu_custom_call.1} parent=1 // pred_fallthru
      _
    // Predicated region
    $region10: #{tpu_custom_call.1} parent=1 // pred_check
      _
    $region11: #{tpu_custom_call.1} parent=1 // pred_check_branch
      %15 = sbr.rel (0) target = $region13
    $region12: #{tpu_custom_call.1} parent=1 // pred_region
      _
    $region13: #{tpu_custom_call.1} parent=1 // pred_fallthru
      _
    // Predicated region
    $region14: #{tpu_custom_call.1} parent=1 // pred_check
      _
    $region15: #{tpu_custom_call.1} parent=1 // pred_check_branch
      %17 = sbr.rel (0) target = $region17
    $region16: #{tpu_custom_call.1} parent=1 // pred_region
      _
    $region17: #{tpu_custom_call.1} parent=1 // pred_fallthru
      _
    %v18 = vld [vmem:[%s0] sm:$0xff]
    %v19 = vld [vmem:[%s0 + $0x8] sm:$0xff]
    %v20 = vld [vmem:[%s0 + $0x10] sm:$0xff]
    %v21 = vld [vmem:[%s0 + $0x18] sm:$0xff]
    %v22 = vld [vmem:[%s0 + $0x20] sm:$0x1]
    %v23 = vld [vmem:[%s0 + $0x28] sm:$0xff]
    %v24 = vld [vmem:[%s0 + $0x30] sm:$0xff]
    %v25 = vld [vmem:[%s0 + $0x38] sm:$0xff]
    %v26 = vld [vmem:[%s0 + $0x40] sm:$0xff]
    %v27 = vld [vmem:[%s0 + $0x48] sm:$0x1]
    %v28 = vld [vmem:[%s0 + $0x50] sm:$0xff]
    %v29 = vld [vmem:[%s0 + $0x58] sm:$0xff]
    %v30 = vld [vmem:[%s0 + $0x60] sm:$0xff]
    %v31 = vld [vmem:[%s0 + $0x68] sm:$0xff]
    %v32 = vld [vmem:[%s0 + $0x70] sm:$0x1]
    %v33 = vld [vmem:[%s0 + $0x78] sm:$0xff]
    %v34 = vld [vmem:[%s0 + $0x80] sm:$0xff]
    %v35 = vld [vmem:[%s0 + $0x88] sm:$0xff]
    %v36 = vld [vmem:[%s0 + $0x90] sm:$0xff]
    %v37 = vld [vmem:[%s0 + $0x98] sm:$0x1]
    %v38 = vld [vmem:[%s1] sm:$0xff]
    %v39 = vld [vmem:[%s1 + $0x8] sm:$0xff]
    %v40 = vld [vmem:[%s1 + $0x10] sm:$0xff]
    %v41 = vld [vmem:[%s1 + $0x18] sm:$0xff]
    %v42 = vld [vmem:[%s1 + $0x28] sm:$0xff]
    %v43 = vld [vmem:[%s1 + $0x30] sm:$0xff]
    %v44 = vld [vmem:[%s1 + $0x38] sm:$0xff]
    %v45 = vld [vmem:[%s1 + $0x40] sm:$0xff]
    %v46 = vld [vmem:[%s1 + $0x50] sm:$0xff]
    %v47 = vld [vmem:[%s1 + $0x58] sm:$0xff]
    %v48 = vld [vmem:[%s1 + $0x60] sm:$0xff]
    %v49 = vld [vmem:[%s1 + $0x68] sm:$0xff]
    %v50 = vld [vmem:[%s1 + $0x78] sm:$0xff]
    %v51 = vld [vmem:[%s1 + $0x80] sm:$0xff]
    %v52 = vld [vmem:[%s1 + $0x88] sm:$0xff]
    %v53 = vld [vmem:[%s1 + $0x90] sm:$0xff]
    %vm74 = vcmask 1046528
    %v75 = vrot.slane %v18, 1
    %v76 = vrot.slane %v19, 1
    %v77 = vsel %vm74, %v75, %v76
    %v78 = vrot.slane %v20, 1
    %v79 = vsel %vm74, %v76, %v78
    %v80 = vrot.slane %v21, 1
    %v81 = vsel %vm74, %v78, %v80
    %v82 = vrot.slane %v22, 1
    %v83 = vsel %vm74, %v80, %v82
    %v84 = vrot.slane %v23, 1
    %v85 = vrot.slane %v24, 1
    %v86 = vsel %vm74, %v84, %v85
    %v87 = vrot.slane %v25, 1
    %v88 = vsel %vm74, %v85, %v87
    %v89 = vrot.slane %v26, 1
    %v90 = vsel %vm74, %v87, %v89
    %v91 = vrot.slane %v27, 1
    %v92 = vsel %vm74, %v89, %v91
    %v93 = vrot.slane %v28, 1
    %v94 = vrot.slane %v29, 1
    %v95 = vsel %vm74, %v93, %v94
    %v96 = vrot.slane %v30, 1
    %v97 = vsel %vm74, %v94, %v96
    %v98 = vrot.slane %v31, 1
    %v99 = vsel %vm74, %v96, %v98
    %v100 = vrot.slane %v32, 1
    %v101 = vsel %vm74, %v98, %v100
    %v102 = vrot.slane %v33, 1
    %v103 = vrot.slane %v34, 1
    %v104 = vsel %vm74, %v102, %v103
    %v105 = vrot.slane %v35, 1
    %v106 = vsel %vm74, %v103, %v105
    %v107 = vrot.slane %v36, 1
    %v108 = vsel %vm74, %v105, %v107
    %v109 = vrot.slane %v37, 1
    %v110 = vsel %vm74, %v107, %v109
    %v127 = vld [vmem:[%s2] sm:$0xff]
    %v128 = vld [vmem:[%s2 + $0x8] sm:$0xff]
    %v129 = vld [vmem:[%s2 + $0x10] sm:$0xff]
    %v130 = vld [vmem:[%s2 + $0x18] sm:$0xff]
    %v131 = vld [vmem:[%s2 + $0x20] sm:$0xff]
    %v132 = vld [vmem:[%s2 + $0x28] sm:$0xff]
    %v133 = vld [vmem:[%s2 + $0x30] sm:$0xff]
    %v134 = vld [vmem:[%s2 + $0x38] sm:$0xff]
    %v135 = vld [vmem:[%s2 + $0x40] sm:$0xff]
    %v136 = vld [vmem:[%s2 + $0x48] sm:$0xff]
    %v137 = vld [vmem:[%s2 + $0x50] sm:$0xff]
    %v138 = vld [vmem:[%s2 + $0x58] sm:$0xff]
    %v139 = vld [vmem:[%s2 + $0x60] sm:$0xff]
    %v140 = vld [vmem:[%s2 + $0x68] sm:$0xff]
    %v141 = vld [vmem:[%s2 + $0x70] sm:$0xff]
    %v142 = vld [vmem:[%s2 + $0x78] sm:$0xff]
    %v143 = vld [vmem:[%s2 + $0x80] sm:$0xff]
    %v144 = vld [vmem:[%s2 + $0x88] sm:$0xff]
    %v145 = vld [vmem:[%s2 + $0x90] sm:$0xff]
    %v146 = vld [vmem:[%s2 + $0x98] sm:$0xff]
    %v147 = vld [vmem:[%s2 + $0xa0] sm:$0xff]
    %v148 = vld [vmem:[%s2 + $0xa8] sm:$0xff]
    %v149 = vld [vmem:[%s2 + $0xb0] sm:$0xff]
    %v150 = vld [vmem:[%s2 + $0xb8] sm:$0xff]
    %v151 = vld [vmem:[%s2 + $0xc0] sm:$0xff]
    %v152 = vld [vmem:[%s2 + $0xc8] sm:$0xff]
    %v153 = vld [vmem:[%s2 + $0xd0] sm:$0xff]
    %v154 = vld [vmem:[%s2 + $0xd8] sm:$0xff]
    %v155 = vld [vmem:[%s2 + $0xe0] sm:$0xff]
    %v156 = vld [vmem:[%s2 + $0xe8] sm:$0xff]
    %v157 = vld [vmem:[%s2 + $0xf0] sm:$0xff]
    %v158 = vld [vmem:[%s2 + $0xf8] sm:$0xff]
    %v159 = vld [vmem:[%s2 + $0x100] sm:$0xff]
    %v160 = vld [vmem:[%s2 + $0x108] sm:$0xff]
    %v161 = vld [vmem:[%s2 + $0x110] sm:$0xff]
    %v162 = vld [vmem:[%s2 + $0x118] sm:$0xff]
    %v163 = vld [vmem:[%s2 + $0x120] sm:$0xff]
    %v164 = vld [vmem:[%s2 + $0x128] sm:$0xff]
    %v165 = vld [vmem:[%s2 + $0x130] sm:$0xff]
    %v166 = vld [vmem:[%s2 + $0x138] sm:$0xff]
    %v167 = vld [vmem:[%s2 + $0x140] sm:$0xff]
    %v168 = vld [vmem:[%s2 + $0x148] sm:$0xff]
    %v169 = vld [vmem:[%s2 + $0x150] sm:$0xff]
    %v170 = vld [vmem:[%s2 + $0x158] sm:$0xff]
    %v171 = vld [vmem:[%s2 + $0x160] sm:$0xff]
    %v172 = vld [vmem:[%s2 + $0x168] sm:$0xff]
    %v173 = vld [vmem:[%s2 + $0x170] sm:$0xff]
    %v174 = vld [vmem:[%s2 + $0x178] sm:$0xff]
    %v175 = vld [vmem:[%s3] sm:$0x1]
    %v177 = vlaneseq
    %v178 = vshrl.u32 %v177, 7
    %v179 = vsub.s32 0, %v178
    %v180 = vrot.slane %v175, %v179
    %182 = vmatprep.subr.mxu0 0.0
    %183 = vmatpush1.msra.mxu0 %v142
    %184 = vmatprep.subr.mxu0 0.0
    %185 = vmatpush1.msra.mxu0 %v141
    %186 = vmatprep.subr.mxu0 0.0
    %187 = vmatpush1.msra.mxu0 %v140
    %188 = vmatprep.subr.mxu0 0.0
    %189 = vmatpush1.msra.mxu0 %v139
    %190 = vmatprep.subr.mxu0 0.0
    %191 = vmatpush1.msra.mxu0 %v138
    %192 = vmatprep.subr.mxu0 0.0
    %193 = vmatpush1.msra.mxu0 %v137
    %194 = vmatprep.subr.mxu0 0.0
    %195 = vmatpush1.msra.mxu0 %v136
    %196 = vmatprep.subr.mxu0 0.0
    %197 = vmatpush1.msra.mxu0 %v135
    %198 = vmatprep.subr.mxu0 0.0
    %199 = vmatpush1.msra.mxu0 %v134
    %200 = vmatprep.subr.mxu0 0.0
    %201 = vmatpush1.msra.mxu0 %v133
    %202 = vmatprep.subr.mxu0 0.0
    %203 = vmatpush1.msra.mxu0 %v132
    %204 = vmatprep.subr.mxu0 0.0
    %205 = vmatpush1.msra.mxu0 %v131
    %206 = vmatprep.subr.mxu0 0.0
    %207 = vmatpush1.msra.mxu0 %v130
    %208 = vmatprep.subr.mxu0 0.0
    %209 = vmatpush1.msra.mxu0 %v129
    %210 = vmatprep.subr.mxu0 0.0
    %211 = vmatpush1.msra.mxu0 %v128
    %212 = vmatprep.subr.mxu0 0.0
    %213 = vmatpush1.msra.mxu0 %v127
    %214 = vmatprep.subr.mxu0 0.0
    %215 = vmatpush2.msra.mxu0 %v158
    %216 = vmatprep.subr.mxu0 0.0
    %217 = vmatpush2.msra.mxu0 %v157
    %218 = vmatprep.subr.mxu0 0.0
    %219 = vmatpush2.msra.mxu0 %v156
    %220 = vmatprep.subr.mxu0 0.0
    %221 = vmatpush2.msra.mxu0 %v155
    %222 = vmatprep.subr.mxu0 0.0
    %223 = vmatpush2.msra.mxu0 %v154
    %224 = vmatprep.subr.mxu0 0.0
    %225 = vmatpush2.msra.mxu0 %v153
    %226 = vmatprep.subr.mxu0 0.0
    %227 = vmatpush2.msra.mxu0 %v152
    %228 = vmatprep.subr.mxu0 0.0
    %229 = vmatpush2.msra.mxu0 %v151
    %230 = vmatprep.subr.mxu0 0.0
    %231 = vmatpush2.msra.mxu0 %v150
    %232 = vmatprep.subr.mxu0 0.0
    %233 = vmatpush2.msra.mxu0 %v149
    %234 = vmatprep.subr.mxu0 0.0
    %235 = vmatpush2.msra.mxu0 %v148
    %236 = vmatprep.subr.mxu0 0.0
    %237 = vmatpush2.msra.mxu0 %v147
    %238 = vmatprep.subr.mxu0 0.0
    %239 = vmatpush2.msra.mxu0 %v146
    %240 = vmatprep.subr.mxu0 0.0
    %241 = vmatpush2.msra.mxu0 %v145
    %242 = vmatprep.subr.mxu0 0.0
    %243 = vmatpush2.msra.mxu0 %v144
    %244 = vmatprep.subr.mxu0 0.0
    %245 = vmatpush2.msra.mxu0 %v143
    %246 = vmatprep.mubr.f32.mxu0 %v38
    %247 = vmatmul.mubr.f32.gmra.mxu0 %v18
    %v248 = vpop.f32.mrf.mxu0
    %v249 = vadd.f32 %v180, %v248
    %v250 = vpop.f32.mrf.mxu0
    %251 = vmatprep.mubr.f32.mxu0 %v39
    %252 = vmatmul.mubr.f32.gmra.mxu0 %v19
    %v253 = vpop.f32.mrf.mxu0
    %v254 = vadd.f32 %v180, %v253
    %v255 = vpop.f32.mrf.mxu0
    %256 = vmatprep.mubr.f32.mxu0 %v40
    %257 = vmatmul.mubr.f32.gmra.mxu0 %v20
    %v258 = vpop.f32.mrf.mxu0
    %v259 = vadd.f32 %v180, %v258
    %v260 = vpop.f32.mrf.mxu0
    %261 = vmatprep.mubr.f32.mxu0 %v41
    %262 = vmatmul.mubr.f32.gmra.mxu0 %v21
    %v263 = vpop.f32.mrf.mxu0
    %v264 = vadd.f32 %v180, %v263
    %v265 = vpop.f32.mrf.mxu0
    %266 = vmatprep.mubr.f32.mxu0 %v42
    %267 = vmatmul.mubr.f32.gmra.mxu0 %v23
    %v268 = vpop.f32.mrf.mxu0
    %v269 = vadd.f32 %v180, %v268
    %v270 = vpop.f32.mrf.mxu0
    %271 = vmatprep.mubr.f32.mxu0 %v43
    %272 = vmatmul.mubr.f32.gmra.mxu0 %v24
    %v273 = vpop.f32.mrf.mxu0
    %v274 = vadd.f32 %v180, %v273
    %v275 = vpop.f32.mrf.mxu0
    %276 = vmatprep.mubr.f32.mxu0 %v44
    %277 = vmatmul.mubr.f32.gmra.mxu0 %v25
    %v278 = vpop.f32.mrf.mxu0
    %v279 = vadd.f32 %v180, %v278
    %v280 = vpop.f32.mrf.mxu0
    %281 = vmatprep.mubr.f32.mxu0 %v45
    %282 = vmatmul.mubr.f32.gmra.mxu0 %v26
    %v283 = vpop.f32.mrf.mxu0
    %v284 = vadd.f32 %v180, %v283
    %v285 = vpop.f32.mrf.mxu0
    %286 = vmatprep.mubr.f32.mxu0 %v46
    %287 = vmatmul.mubr.f32.gmra.mxu0 %v28
    %v288 = vpop.f32.mrf.mxu0
    %v289 = vadd.f32 %v180, %v288
    %v290 = vpop.f32.mrf.mxu0
    %291 = vmatprep.mubr.f32.mxu0 %v47
    %292 = vmatmul.mubr.f32.gmra.mxu0 %v29
    %v293 = vpop.f32.mrf.mxu0
    %v294 = vadd.f32 %v180, %v293
    %v295 = vpop.f32.mrf.mxu0
    %296 = vmatprep.mubr.f32.mxu0 %v48
    %297 = vmatmul.mubr.f32.gmra.mxu0 %v30
    %v298 = vpop.f32.mrf.mxu0
    %v299 = vadd.f32 %v180, %v298
    %v300 = vpop.f32.mrf.mxu0
    %301 = vmatprep.mubr.f32.mxu0 %v49
    %302 = vmatmul.mubr.f32.gmra.mxu0 %v31
    %v303 = vpop.f32.mrf.mxu0
    %v304 = vadd.f32 %v180, %v303
    %v305 = vpop.f32.mrf.mxu0
    %306 = vmatprep.mubr.f32.mxu0 %v50
    %307 = vmatmul.mubr.f32.gmra.mxu0 %v33
    %v308 = vpop.f32.mrf.mxu0
    %v309 = vadd.f32 %v180, %v308
    %v310 = vpop.f32.mrf.mxu0
    %311 = vmatprep.mubr.f32.mxu0 %v51
    %312 = vmatmul.mubr.f32.gmra.mxu0 %v34
    %v313 = vpop.f32.mrf.mxu0
    %v314 = vadd.f32 %v180, %v313
    %v315 = vpop.f32.mrf.mxu0
    %316 = vmatprep.mubr.f32.mxu0 %v52
    %317 = vmatmul.mubr.f32.gmra.mxu0 %v35
    %v318 = vpop.f32.mrf.mxu0
    %v319 = vadd.f32 %v180, %v318
    %v320 = vpop.f32.mrf.mxu0
    %321 = vmatprep.mubr.f32.mxu0 %v53
    %322 = vmatmul.mubr.f32.gmra.mxu0 %v36
    %v323 = vpop.f32.mrf.mxu0
    %v324 = vadd.f32 %v180, %v323
    %v325 = vpop.f32.mrf.mxu0
    %326 = vdwg.mxu0
    %327 = vmatprep.subr.mxu0 0.0
    %328 = vmatpush1.msra.mxu0 %v174
    %329 = vmatprep.subr.mxu0 0.0
    %330 = vmatpush1.msra.mxu0 %v173
    %331 = vmatprep.subr.mxu0 0.0
    %332 = vmatpush1.msra.mxu0 %v172
    %333 = vmatprep.subr.mxu0 0.0
    %334 = vmatpush1.msra.mxu0 %v171
    %335 = vmatprep.subr.mxu0 0.0
    %336 = vmatpush1.msra.mxu0 %v170
    %337 = vmatprep.subr.mxu0 0.0
    %338 = vmatpush1.msra.mxu0 %v169
    %339 = vmatprep.subr.mxu0 0.0
    %340 = vmatpush1.msra.mxu0 %v168
    %341 = vmatprep.subr.mxu0 0.0
    %342 = vmatpush1.msra.mxu0 %v167
    %343 = vmatprep.subr.mxu0 0.0
    %344 = vmatpush1.msra.mxu0 %v166
    %345 = vmatprep.subr.mxu0 0.0
    %346 = vmatpush1.msra.mxu0 %v165
    %347 = vmatprep.subr.mxu0 0.0
    %348 = vmatpush1.msra.mxu0 %v164
    %349 = vmatprep.subr.mxu0 0.0
    %350 = vmatpush1.msra.mxu0 %v163
    %351 = vmatprep.subr.mxu0 0.0
    %352 = vmatpush1.msra.mxu0 %v162
    %353 = vmatprep.subr.mxu0 0.0
    %354 = vmatpush1.msra.mxu0 %v161
    %355 = vmatprep.subr.mxu0 0.0
    %356 = vmatpush1.msra.mxu0 %v160
    %357 = vmatprep.subr.mxu0 0.0
    %358 = vmatpush1.msra.mxu0 %v159
    %359 = vmatprep.subr.mxu0 0.0
    %360 = vmatpush2.msra.mxu0 0.0
    %361 = vmatprep.subr.mxu0 0.0
    %362 = vmatpush2.msra.mxu0 0.0
    %363 = vmatprep.subr.mxu0 0.0
    %364 = vmatpush2.msra.mxu0 0.0
    %365 = vmatprep.subr.mxu0 0.0
    %366 = vmatpush2.msra.mxu0 0.0
    %367 = vmatprep.subr.mxu0 0.0
    %368 = vmatpush2.msra.mxu0 0.0
    %369 = vmatprep.subr.mxu0 0.0
    %370 = vmatpush2.msra.mxu0 0.0
    %371 = vmatprep.subr.mxu0 0.0
    %372 = vmatpush2.msra.mxu0 0.0
    %373 = vmatprep.subr.mxu0 0.0
    %374 = vmatpush2.msra.mxu0 0.0
    %375 = vmatprep.subr.mxu0 0.0
    %376 = vmatpush2.msra.mxu0 0.0
    %377 = vmatprep.subr.mxu0 0.0
    %378 = vmatpush2.msra.mxu0 0.0
    %379 = vmatprep.subr.mxu0 0.0
    %380 = vmatpush2.msra.mxu0 0.0
    %381 = vmatprep.subr.mxu0 0.0
    %382 = vmatpush2.msra.mxu0 0.0
    %383 = vmatprep.subr.mxu0 0.0
    %384 = vmatpush2.msra.mxu0 0.0
    %385 = vmatprep.subr.mxu0 0.0
    %386 = vmatpush2.msra.mxu0 0.0
    %387 = vmatprep.subr.mxu0 0.0
    %388 = vmatpush2.msra.mxu0 0.0
    %389 = vmatprep.subr.mxu0 0.0
    %390 = vmatpush2.msra.mxu0 0.0
    %391 = vmatprep.mubr.f32.mxu0 0.0
    %392 = vmatmul.mubr.f32.gmra.mxu0 %v77
    %v393 = vpop.f32.mrf.mxu0
    %v394 = vadd.f32 %v249, %v393
    %v395 = vpop.f32.mrf.mxu0
    %396 = vmatprep.mubr.f32.mxu0 0.0
    %397 = vmatmul.mubr.f32.gmra.mxu0 %v79
    %v398 = vpop.f32.mrf.mxu0
    %v399 = vadd.f32 %v254, %v398
    %v400 = vpop.f32.mrf.mxu0
    %401 = vmatprep.mubr.f32.mxu0 0.0
    %402 = vmatmul.mubr.f32.gmra.mxu0 %v81
    %v403 = vpop.f32.mrf.mxu0
    %v404 = vadd.f32 %v259, %v403
    %v405 = vpop.f32.mrf.mxu0
    %406 = vmatprep.mubr.f32.mxu0 0.0
    %407 = vmatmul.mubr.f32.gmra.mxu0 %v83
    %v408 = vpop.f32.mrf.mxu0
    %v409 = vadd.f32 %v264, %v408
    %v410 = vpop.f32.mrf.mxu0
    %411 = vmatprep.mubr.f32.mxu0 0.0
    %412 = vmatmul.mubr.f32.gmra.mxu0 %v86
    %v413 = vpop.f32.mrf.mxu0
    %v414 = vadd.f32 %v269, %v413
    %v415 = vpop.f32.mrf.mxu0
    %416 = vmatprep.mubr.f32.mxu0 0.0
    %417 = vmatmul.mubr.f32.gmra.mxu0 %v88
    %v418 = vpop.f32.mrf.mxu0
    %v419 = vadd.f32 %v274, %v418
    %v420 = vpop.f32.mrf.mxu0
    %421 = vmatprep.mubr.f32.mxu0 0.0
    %422 = vmatmul.mubr.f32.gmra.mxu0 %v90
    %v423 = vpop.f32.mrf.mxu0
    %v424 = vadd.f32 %v279, %v423
    %v425 = vpop.f32.mrf.mxu0
    %426 = vmatprep.mubr.f32.mxu0 0.0
    %427 = vmatmul.mubr.f32.gmra.mxu0 %v92
    %v428 = vpop.f32.mrf.mxu0
    %v429 = vadd.f32 %v284, %v428
    %v430 = vpop.f32.mrf.mxu0
    %431 = vmatprep.mubr.f32.mxu0 0.0
    %432 = vmatmul.mubr.f32.gmra.mxu0 %v95
    %v433 = vpop.f32.mrf.mxu0
    %v434 = vadd.f32 %v289, %v433
    %v435 = vpop.f32.mrf.mxu0
    %436 = vmatprep.mubr.f32.mxu0 0.0
    %437 = vmatmul.mubr.f32.gmra.mxu0 %v97
    %v438 = vpop.f32.mrf.mxu0
    %v439 = vadd.f32 %v294, %v438
    %v440 = vpop.f32.mrf.mxu0
    %441 = vmatprep.mubr.f32.mxu0 0.0
    %442 = vmatmul.mubr.f32.gmra.mxu0 %v99
    %v443 = vpop.f32.mrf.mxu0
    %v444 = vadd.f32 %v299, %v443
    %v445 = vpop.f32.mrf.mxu0
    %446 = vmatprep.mubr.f32.mxu0 0.0
    %447 = vmatmul.mubr.f32.gmra.mxu0 %v101
    %v448 = vpop.f32.mrf.mxu0
    %v449 = vadd.f32 %v304, %v448
    %v450 = vpop.f32.mrf.mxu0
    %451 = vmatprep.mubr.f32.mxu0 0.0
    %452 = vmatmul.mubr.f32.gmra.mxu0 %v104
    %v453 = vpop.f32.mrf.mxu0
    %v454 = vadd.f32 %v309, %v453
    %v455 = vpop.f32.mrf.mxu0
    %456 = vmatprep.mubr.f32.mxu0 0.0
    %457 = vmatmul.mubr.f32.gmra.mxu0 %v106
    %v458 = vpop.f32.mrf.mxu0
    %v459 = vadd.f32 %v314, %v458
    %v460 = vpop.f32.mrf.mxu0
    %461 = vmatprep.mubr.f32.mxu0 0.0
    %462 = vmatmul.mubr.f32.gmra.mxu0 %v108
    %v463 = vpop.f32.mrf.mxu0
    %v464 = vadd.f32 %v319, %v463
    %v465 = vpop.f32.mrf.mxu0
    %466 = vmatprep.mubr.f32.mxu0 0.0
    %467 = vmatmul.mubr.f32.gmra.mxu0 %v110
    %v468 = vpop.f32.mrf.mxu0
    %v469 = vadd.f32 %v324, %v468
    %v470 = vpop.f32.mrf.mxu0
    %471 = vdwg.mxu0
    %472 = vst [vmem:[#allocation2] sm:$0xff] %v394
    %473 = vst [vmem:[#allocation2 + $0x8] sm:$0xff] %v399
    %474 = vst [vmem:[#allocation2 + $0x10] sm:$0xff] %v404
    %475 = vst [vmem:[#allocation2 + $0x18] sm:$0xff] %v409
    %476 = vst [vmem:[#allocation2 + $0x20] sm:$0xff] %v414
    %477 = vst [vmem:[#allocation2 + $0x28] sm:$0xff] %v419
    %478 = vst [vmem:[#allocation2 + $0x30] sm:$0xff] %v424
    %479 = vst [vmem:[#allocation2 + $0x38] sm:$0xff] %v429
    %480 = vst [vmem:[#allocation2 + $0x40] sm:$0xff] %v434
    %481 = vst [vmem:[#allocation2 + $0x48] sm:$0xff] %v439
    %482 = vst [vmem:[#allocation2 + $0x50] sm:$0xff] %v444
    %483 = vst [vmem:[#allocation2 + $0x58] sm:$0xff] %v449
    %484 = vst [vmem:[#allocation2 + $0x60] sm:$0xff] %v454
    %485 = vst [vmem:[#allocation2 + $0x68] sm:$0xff] %v459
    %486 = vst [vmem:[#allocation2 + $0x70] sm:$0xff] %v464
    %487 = vst [vmem:[#allocation2 + $0x78] sm:$0xff] %v469
    // Predicated region
    $region18: #{tpu_custom_call.1} parent=1 // pred_check
      _
    $region19: #{tpu_custom_call.1} parent=1 // pred_check_branch
      %489 = sbr.rel (0) target = $region21
    $region20: #{tpu_custom_call.1} parent=1 // pred_region
      %s491 = ssub.s32 2048, 2048
      %492 = vsyncadd [#allocation3], %s491
      %s493 = sshll.u32 [#allocation2], 4
      %s494 = int_to_ptr.vmem [resolvable:$true] %s493
      %499 = dma.vmem_to_hbm [thread:$0]  %s494, 2048, %s4, [#allocation3], 128, 128, 8
    $region21: #{tpu_custom_call.1} parent=1 // pred_fallthru
      _
    // Predicated region
    $region22: #{tpu_custom_call.1} parent=1 // pred_check
      _
    $region23: #{tpu_custom_call.1} parent=1 // pred_check_branch
      %501 = sbr.rel (0) target = $region25
    $region24: #{tpu_custom_call.1} parent=1 // pred_region
      %502 = dma.done [#allocation3], 2048
    $region25: #{tpu_custom_call.1} parent=1 // pred_fallthru
      _
    %503 = vsyncpa [#allocation3], 1

</llo_original>
